<compile_context>
chip_gen: v5e
topology: v5e:2x2
jax: 0.10.0
libtpu: 0.0.40
codegen_flags: <defaults>
</compile_context>

<pallas_src>
import functools

import jax
import jax.numpy as jnp
from jax.experimental import pallas as pl
from jax.experimental.pallas import tpu as pltpu

_LANE = 128      # vreg lane width
_SUBLANE = 8     # vreg sublane count


def _round_up(n, m):
    return ((n + m - 1) // m) * m


def _mlp_fused_kernel(x_ref, params_ref, o_ref, *, layer_dims):
    """Fused MLP forward.

    x_ref      : (B_pad, pad_in_0)      bf16 VMEM
    params_ref : (rows_total, slab_w)   bf16 VMEM packed slab; per layer:
                 [pad_in rows of W^T (zero-padded) | 8 rows, row 0 = bias]
    o_ref      : (B_pad, pad_out_last)  f32 VMEM (lane-dense, unmasked store)
    All slices below use static Python ints -> zero-cost ref views.
    """
    n_layers = len(layer_dims)
    h = x_ref[...]                                     # bf16 (B, pad_in_0)
    row = 0
    for i, (pin, pout) in enumerate(layer_dims):
        w = params_ref[row:row + pin, :pout]           # bf16 (pin, pout)
        row += pin
        b = params_ref[row:row + 1, :pout].astype(jnp.float32)   # (1, pout)
        row += _SUBLANE
        # MXU matmul with f32 accumulation; bias (+ReLU) epilogue on the VPU.
        acc = jnp.dot(h, w, preferred_element_type=jnp.float32) + b
        if i < n_layers - 1:
            acc = jnp.maximum(acc, 0.0)
            h = acc.astype(jnp.bfloat16)               # bf16 feeds next MXU matmul
        else:
            o_ref[...] = acc.astype(o_ref.dtype)


def init_fully_connected_params(key, layer_sizes, dtype=jnp.float32):
    """Synthetic init matching nn.Linear shapes: W (out, in), b (out,)."""
    params = []
    for i in range(len(layer_sizes) - 1):
        fan_in, fan_out = layer_sizes[i], layer_sizes[i + 1]
        key, kw, kb = jax.random.split(key, 3)
        bound = 1.0 / jnp.sqrt(jnp.asarray(fan_in, dtype))
        w = jax.random.uniform(kw, (fan_out, fan_in), dtype, -bound, bound)
        b = jax.random.uniform(kb, (fan_out,), dtype, -bound, bound)
        params.append((w, b))
    return params


def prepare_params(params, dtype=jnp.bfloat16):
    """One-time layout prep (hoisted out of the hot path).

    * transpose W (out,in) -> (in,out)
    * zero-pad every in/out width up to a multiple of 128 (lane width)
    * cast to bf16
    * pack all layers' weights + biases into a single (rows, slab_w) slab
    Returns (slab, layer_dims) where layer_dims[i] = (pad_in_i, pad_out_i).
    """
    layer_dims = []
    for w, _ in params:
        fan_out, fan_in = w.shape
        layer_dims.append((_round_up(fan_in, _LANE), _round_up(fan_out, _LANE)))
    slab_w = max(pout for _, pout in layer_dims)

    blocks = []
    for (w, b), (pin, pout) in zip(params, layer_dims):
        fan_out, fan_in = w.shape
        w_blk = jnp.zeros((pin, slab_w), dtype)
        w_blk = w_blk.at[:fan_in, :fan_out].set(jnp.transpose(w).astype(dtype))
        b_blk = jnp.zeros((_SUBLANE, slab_w), dtype)
        b_blk = b_blk.at[0, :fan_out].set(b.astype(dtype))
        blocks.append(w_blk)
        blocks.append(b_blk)
    slab = jnp.concatenate(blocks, axis=0)   # rows = sum(pad_in_i + 8), all %8 == 0
    return slab, tuple(layer_dims)


def fully_connected_net_forward(x, slab, layer_dims, out_features):
    """Single fused Pallas kernel for the whole MLP (lane-padded, bf16 params)."""
    B, d_in = x.shape
    pin0 = layer_dims[0][0]
    pout_last = layer_dims[-1][1]
    b_pad = _round_up(max(B, 1), _SUBLANE)

    # Pad + cast the input once (cheap XLA ops outside the kernel).
    xp = jnp.zeros((b_pad, pin0), jnp.bfloat16)
    xp = xp.at[:B, :d_in].set(x.astype(jnp.bfloat16))

    flops = 2 * b_pad * sum(pin * pout for pin, pout in layer_dims)
    bytes_accessed = (xp.size * xp.dtype.itemsize
                      + slab.size * slab.dtype.itemsize
                      + b_pad * pout_last * 4)

    kernel = functools.partial(_mlp_fused_kernel, layer_dims=tuple(layer_dims))
    vmem = pl.BlockSpec(memory_space=pltpu.MemorySpace.VMEM)

    out_padded = pl.pallas_call(
        kernel,
        out_shape=jax.ShapeDtypeStruct((b_pad, pout_last), jnp.float32),
        in_specs=[vmem, vmem],
        out_specs=vmem,
        cost_estimate=pl.CostEstimate(flops=flops, transcendentals=0,
                                      bytes_accessed=bytes_accessed),
    )(xp, slab)
    return out_padded[:B, :out_features]


def _reference_forward(x, params):
    """Reference matching the kernel's numerics: bf16 params/activations, f32 math."""
    n = len(params)
    h = x.astype(jnp.bfloat16)
    for i, (w, b) in enumerate(params):
        w_bf = jnp.transpose(w).astype(jnp.bfloat16).astype(jnp.float32)
        b_bf = b.astype(jnp.bfloat16).astype(jnp.float32)
        acc = jnp.dot(h.astype(jnp.float32), w_bf) + b_bf
        if i < n - 1:
            acc = jnp.maximum(acc, 0.0)
            h = acc.astype(jnp.bfloat16)
        else:
            return acc
    return h


if __name__ == "__main__":
    layer_sizes = [32, 64, 48, 16]   # input, hidden, hidden, output
    batch = 8

    key = jax.random.PRNGKey(0)
    key, kx = jax.random.split(key)
    x = jax.random.normal(kx, (batch, layer_sizes[0]), jnp.float32)
    params = init_fully_connected_params(key, layer_sizes)

    slab, layer_dims = prepare_params(params)    # one-time pack/pad/cast
    out = fully_connected_net_forward(x, slab, layer_dims, layer_sizes[-1])
    out = jax.block_until_ready(out)

    ref = _reference_forward(x, params)
    assert out.shape == (batch, layer_sizes[-1])
    assert jnp.allclose(out, ref, atol=2e-2, rtol=2e-2), float(jnp.max(jnp.abs(out - ref)))

    print("KERNEL_OK")
</pallas_src>

<mosaic_0001>
module attributes {stable_mosaic.version = 11 : i64} {
  func.func @_mlp_fused_kernel(%arg0: memref<8x128xbf16, #tpu.memory_space<vmem>>, %arg1: memref<408x128xbf16, #tpu.memory_space<vmem>>, %arg2: memref<8x128xf32, #tpu.memory_space<vmem>>) attributes {dimension_semantics = [], scalar_prefetch = 0 : i64, scratch_operands = 0 : i64, tpu.core_type = #tpu.core_type<tc>} {
    %c0 = arith.constant 0 : index
    %c0_0 = arith.constant 0 : index
    %0 = vector.load %arg0[%c0, %c0_0] : memref<8x128xbf16, #tpu.memory_space<vmem>>, vector<8x128xbf16>
    %c0_1 = arith.constant 0 : index
    %c0_2 = arith.constant 0 : index
    %1 = vector.load %arg1[%c0_1, %c0_2] : memref<408x128xbf16, #tpu.memory_space<vmem>>, vector<128x128xbf16>
    %c128 = arith.constant 128 : index
    %c0_3 = arith.constant 0 : index
    %2 = vector.load %arg1[%c128, %c0_3] : memref<408x128xbf16, #tpu.memory_space<vmem>>, vector<1x128xbf16>
    %3 = arith.extf %2 : vector<1x128xbf16> to vector<1x128xf32>
    %cst = arith.constant dense<0.000000e+00> : vector<8x128xf32>
    %4 = tpu.matmul %0, %1, %cst {dimension_numbers = #tpu.dot_dimension_numbers<[1], [0], [0], [1], [0, 0, 1, 1], [], []>} : vector<8x128xbf16>, vector<128x128xbf16>, vector<8x128xf32> -> vector<8x128xf32>
    %5 = vector.broadcast %3 : vector<1x128xf32> to vector<8x128xf32>
    %6 = arith.addf %4, %5 : vector<8x128xf32>
    %cst_4 = arith.constant 0.000000e+00 : f32
    %7 = vector.broadcast %cst_4 : f32 to vector<8x128xf32>
    %8 = arith.maximumf %6, %7 : vector<8x128xf32>
    %9 = arith.truncf %8 : vector<8x128xf32> to vector<8x128xbf16>
    %c136 = arith.constant 136 : index
    %c0_5 = arith.constant 0 : index
    %10 = vector.load %arg1[%c136, %c0_5] : memref<408x128xbf16, #tpu.memory_space<vmem>>, vector<128x128xbf16>
    %c264 = arith.constant 264 : index
    %c0_6 = arith.constant 0 : index
    %11 = vector.load %arg1[%c264, %c0_6] : memref<408x128xbf16, #tpu.memory_space<vmem>>, vector<1x128xbf16>
    %12 = arith.extf %11 : vector<1x128xbf16> to vector<1x128xf32>
    %cst_7 = arith.constant dense<0.000000e+00> : vector<8x128xf32>
    %13 = tpu.matmul %9, %10, %cst_7 {dimension_numbers = #tpu.dot_dimension_numbers<[1], [0], [0], [1], [0, 0, 1, 1], [], []>} : vector<8x128xbf16>, vector<128x128xbf16>, vector<8x128xf32> -> vector<8x128xf32>
    %14 = vector.broadcast %12 : vector<1x128xf32> to vector<8x128xf32>
    %15 = arith.addf %13, %14 : vector<8x128xf32>
    %cst_8 = arith.constant 0.000000e+00 : f32
    %16 = vector.broadcast %cst_8 : f32 to vector<8x128xf32>
    %17 = arith.maximumf %15, %16 : vector<8x128xf32>
    %18 = arith.truncf %17 : vector<8x128xf32> to vector<8x128xbf16>
    %c272 = arith.constant 272 : index
    %c0_9 = arith.constant 0 : index
    %19 = vector.load %arg1[%c272, %c0_9] : memref<408x128xbf16, #tpu.memory_space<vmem>>, vector<128x128xbf16>
    %c400 = arith.constant 400 : index
    %c0_10 = arith.constant 0 : index
    %20 = vector.load %arg1[%c400, %c0_10] : memref<408x128xbf16, #tpu.memory_space<vmem>>, vector<1x128xbf16>
    %21 = arith.extf %20 : vector<1x128xbf16> to vector<1x128xf32>
    %cst_11 = arith.constant dense<0.000000e+00> : vector<8x128xf32>
    %22 = tpu.matmul %18, %19, %cst_11 {dimension_numbers = #tpu.dot_dimension_numbers<[1], [0], [0], [1], [0, 0, 1, 1], [], []>} : vector<8x128xbf16>, vector<128x128xbf16>, vector<8x128xf32> -> vector<8x128xf32>
    %23 = vector.broadcast %21 : vector<1x128xf32> to vector<8x128xf32>
    %24 = arith.addf %22, %23 : vector<8x128xf32>
    %c0_12 = arith.constant 0 : index
    %c0_13 = arith.constant 0 : index
    %25 = vector.load %arg2[%c0_12, %c0_13] : memref<8x128xf32, #tpu.memory_space<vmem>>, vector<8x128xf32>
    tpu.vector_store %arg2[%c0_12, %c0_13], %24 {strides = array<i32>} : memref<8x128xf32, #tpu.memory_space<vmem>>, vector<8x128xf32>,
    return
  }
}

</mosaic_0001>

<llo_original>
// kernel: tpu_custom_call.1
$region0: #{tpu_custom_call.1}
  #allocation0 [shape = 'u32[]', space=smem, size = 0x4, offset = 0x4, fixed_abs, tag = 'smem constant byte address 0x4 - core index']
  #allocation1 [shape = 'u32[72,128]{1,0:T(1,128)}', space=vmem, size = 0x9000, scoped, tag = 'internal scratch']
  %s0 = inlined_call_operand.hbm [shape: bf16[8,128], index: 0, kind: input, shape index: {}]
  %s1 = inlined_call_operand.hbm [shape: bf16[408,128], index: 1, kind: input, shape index: {}]
  %s2 = inlined_call_operand.hbm [shape: f32[8,128], index: 2, kind: output, shape index: {}]
  %s3 = sld [smem:[#allocation0]]
  $region26: #{tpu_custom_call.1} parent=0
    _
  %s5 = ssub.s32 1, %s3
  %s6 = scalar_select 0, %s5, %s3
  $region1: #{tpu_custom_call.1} parent=0
    #allocation2 [shape = 'u8[2048]{0}', space=vmem, size = 0x800, scoped, tag = 'input window, operand 0, single buffered']
    #allocation3 [shape = 's32[1]{0}', space=sflag, size = 0x4, scoped, tag = 'scoped memory for tpu_custom_call.1']
    #allocation4 [shape = 's32[1]{0}', space=sflag, size = 0x4, scoped, tag = 'scoped memory for tpu_custom_call.1']
    #allocation5 [shape = 'u8[104448]{0}', space=vmem, size = 0x19800, scoped, tag = 'input window, operand 1, single buffered']
    #allocation6 [shape = 's32[1]{0}', space=sflag, size = 0x4, scoped, tag = 'scoped memory for tpu_custom_call.1']
    #allocation7 [shape = 'u8[4096]{0}', space=vmem, size = 0x1000, scoped, tag = 'output window, operand 0, single buffered']
    %7 = vsyncpa [#allocation3], 0
    %8 = vsyncpa [#allocation6], 0
    %9 = vsyncpa [#allocation4], 0
    // Predicated region
    $region2: #{tpu_custom_call.1} parent=1 // pred_check
      _
    $region3: #{tpu_custom_call.1} parent=1 // pred_check_branch
      %11 = sbr.rel (0) target = $region5
    $region4: #{tpu_custom_call.1} parent=1 // pred_region
      %13 = vsyncadd [#allocation3], 0
      %s15 = sshll.u32 %s0, 4
      %s16 = int_to_ptr.hbm [resolvable:$true] %s15
      %s17 = sshll.u32 [#allocation2], 4
      %s18 = int_to_ptr.vmem [resolvable:$true] %s17
      %20 = dma.hbm_to_vmem [thread:$0]  %s16, 64, %s18, [#allocation3]
    $region5: #{tpu_custom_call.1} parent=1 // pred_fallthru
      _
    // Predicated region
    $region6: #{tpu_custom_call.1} parent=1 // pred_check
      _
    $region7: #{tpu_custom_call.1} parent=1 // pred_check_branch
      %22 = sbr.rel (0) target = $region9
    $region8: #{tpu_custom_call.1} parent=1 // pred_region
      %24 = vsyncadd [#allocation6], 0
      %s25 = sshll.u32 %s1, 4
      %s26 = int_to_ptr.hbm [resolvable:$true] %s25
      %s27 = sshll.u32 [#allocation5], 4
      %s28 = int_to_ptr.vmem [resolvable:$true] %s27
      %33 = dma.hbm_to_vmem [thread:$0]  %s26, 3264, %s28, [#allocation6], 64, 64, 4
    $region9: #{tpu_custom_call.1} parent=1 // pred_fallthru
      _
    // Predicated region
    $region10: #{tpu_custom_call.1} parent=1 // pred_check
      _
    $region11: #{tpu_custom_call.1} parent=1 // pred_check_branch
      %35 = sbr.rel (0) target = $region13
    $region12: #{tpu_custom_call.1} parent=1 // pred_region
      %37 = dma.done [#allocation3], 64
    $region13: #{tpu_custom_call.1} parent=1 // pred_fallthru
      _
    // Predicated region
    $region14: #{tpu_custom_call.1} parent=1 // pred_check
      _
    $region15: #{tpu_custom_call.1} parent=1 // pred_check_branch
      %39 = sbr.rel (0) target = $region17
    $region16: #{tpu_custom_call.1} parent=1 // pred_region
      %41 = dma.done [#allocation6], 3264
    $region17: #{tpu_custom_call.1} parent=1 // pred_fallthru
      _
    %v42 = vld [vmem:[#allocation2] sm:$0xf]
    %v43 = vld [vmem:[#allocation5] sm:$0xf]
    %v44 = vld [vmem:[#allocation5 + $0x4] sm:$0xf]
    %v45 = vld [vmem:[#allocation5 + $0x8] sm:$0xf]
    %v46 = vld [vmem:[#allocation5 + $0xc] sm:$0xf]
    %v47 = vld [vmem:[#allocation5 + $0x10] sm:$0xf]
    %v48 = vld [vmem:[#allocation5 + $0x14] sm:$0xf]
    %v49 = vld [vmem:[#allocation5 + $0x18] sm:$0xf]
    %v50 = vld [vmem:[#allocation5 + $0x1c] sm:$0xf]
    %v51 = vld [vmem:[#allocation5 + $0x20] sm:$0xf]
    %v52 = vld [vmem:[#allocation5 + $0x24] sm:$0xf]
    %v53 = vld [vmem:[#allocation5 + $0x28] sm:$0xf]
    %v54 = vld [vmem:[#allocation5 + $0x2c] sm:$0xf]
    %v55 = vld [vmem:[#allocation5 + $0x30] sm:$0xf]
    %v56 = vld [vmem:[#allocation5 + $0x34] sm:$0xf]
    %v57 = vld [vmem:[#allocation5 + $0x38] sm:$0xf]
    %v58 = vld [vmem:[#allocation5 + $0x3c] sm:$0xf]
    %v59 = vld [vmem:[#allocation5 + $0x40] sm:$0x1]
    %v60 = vunpack.c.l.bf16 %v59
    %v61 = vperm.slane %v60, 0
    %v78 = vunpack.c.l.b16 %v43
    %v79 = vunpack.c.l.b16 %v44
    %v80 = vunpack.c.l.b16 %v45
    %v81 = vunpack.c.l.b16 %v46
    %v82 = vunpack.c.l.b16 %v47
    %v83 = vunpack.c.l.b16 %v48
    %v84 = vunpack.c.l.b16 %v49
    %v85 = vunpack.c.l.b16 %v50
    %v86 = vunpack.c.l.b16 %v51
    %v87 = vunpack.c.l.b16 %v52
    %v88 = vunpack.c.l.b16 %v53
    %v89 = vunpack.c.l.b16 %v54
    %v90 = vunpack.c.l.b16 %v55
    %v91 = vunpack.c.l.b16 %v56
    %v92 = vunpack.c.l.b16 %v57
    %v93 = vunpack.c.l.b16 %v58
    %v94 = vpack.c.b16 %v79, %v78
    %v95 = vpack.c.b16 %v81, %v80
    %v96 = vpack.c.b16 %v83, %v82
    %v97 = vpack.c.b16 %v85, %v84
    %v98 = vpack.c.b16 %v87, %v86
    %v99 = vpack.c.b16 %v89, %v88
    %v100 = vpack.c.b16 %v91, %v90
    %v101 = vpack.c.b16 %v93, %v92
    %110 = vmatpush.bf16.msra.mxu0 %v101
    %111 = vmatpush.bf16.msra.mxu0 %v100
    %112 = vmatpush.bf16.msra.mxu0 %v99
    %113 = vmatpush.bf16.msra.mxu0 %v98
    %114 = vmatpush.bf16.msra.mxu0 %v97
    %115 = vmatpush.bf16.msra.mxu0 %v96
    %116 = vmatpush.bf16.msra.mxu0 %v95
    %117 = vmatpush.bf16.msra.mxu0 %v94
    %118 = vmatmul.bf16.gmra.mxu0 %v42
    %v119 = vpop.f32.mrf.mxu0
    %v120 = vadd.f32 %v61, %v119
    %v121 = vpop.f32.mrf.mxu0
    %122 = vdwg.mxu0
    %v123 = vmax.f32 %v120, 0.0
    %v124 = vpack.c.bf16 %v123, %v123
    %v125 = vld [vmem:[#allocation5 + $0x44] sm:$0xf]
    %v126 = vld [vmem:[#allocation5 + $0x48] sm:$0xf]
    %v127 = vld [vmem:[#allocation5 + $0x4c] sm:$0xf]
    %v128 = vld [vmem:[#allocation5 + $0x50] sm:$0xf]
    %v129 = vld [vmem:[#allocation5 + $0x54] sm:$0xf]
    %v130 = vld [vmem:[#allocation5 + $0x58] sm:$0xf]
    %v131 = vld [vmem:[#allocation5 + $0x5c] sm:$0xf]
    %v132 = vld [vmem:[#allocation5 + $0x60] sm:$0xf]
    %v133 = vld [vmem:[#allocation5 + $0x64] sm:$0xf]
    %v134 = vld [vmem:[#allocation5 + $0x68] sm:$0xf]
    %v135 = vld [vmem:[#allocation5 + $0x6c] sm:$0xf]
    %v136 = vld [vmem:[#allocation5 + $0x70] sm:$0xf]
    %v137 = vld [vmem:[#allocation5 + $0x74] sm:$0xf]
    %v138 = vld [vmem:[#allocation5 + $0x78] sm:$0xf]
    %v139 = vld [vmem:[#allocation5 + $0x7c] sm:$0xf]
    %v140 = vld [vmem:[#allocation5 + $0x80] sm:$0xf]
    %v141 = vld [vmem:[#allocation5 + $0x84] sm:$0x1]
    %v142 = vunpack.c.l.bf16 %v141
    %v143 = vperm.slane %v142, 0
    %v160 = vunpack.c.l.b16 %v125
    %v161 = vunpack.c.l.b16 %v126
    %v162 = vunpack.c.l.b16 %v127
    %v163 = vunpack.c.l.b16 %v128
    %v164 = vunpack.c.l.b16 %v129
    %v165 = vunpack.c.l.b16 %v130
    %v166 = vunpack.c.l.b16 %v131
    %v167 = vunpack.c.l.b16 %v132
    %v168 = vunpack.c.l.b16 %v133
    %v169 = vunpack.c.l.b16 %v134
    %v170 = vunpack.c.l.b16 %v135
    %v171 = vunpack.c.l.b16 %v136
    %v172 = vunpack.c.l.b16 %v137
    %v173 = vunpack.c.l.b16 %v138
    %v174 = vunpack.c.l.b16 %v139
    %v175 = vunpack.c.l.b16 %v140
    %v176 = vpack.c.b16 %v161, %v160
    %v177 = vpack.c.b16 %v163, %v162
    %v178 = vpack.c.b16 %v165, %v164
    %v179 = vpack.c.b16 %v167, %v166
    %v180 = vpack.c.b16 %v169, %v168
    %v181 = vpack.c.b16 %v171, %v170
    %v182 = vpack.c.b16 %v173, %v172
    %v183 = vpack.c.b16 %v175, %v174
    %192 = vmatpush.bf16.msra.mxu0 %v183
    %193 = vmatpush.bf16.msra.mxu0 %v182
    %194 = vmatpush.bf16.msra.mxu0 %v181
    %195 = vmatpush.bf16.msra.mxu0 %v180
    %196 = vmatpush.bf16.msra.mxu0 %v179
    %197 = vmatpush.bf16.msra.mxu0 %v178
    %198 = vmatpush.bf16.msra.mxu0 %v177
    %199 = vmatpush.bf16.msra.mxu0 %v176
    %200 = vmatmul.bf16.gmra.mxu0 %v124
    %v201 = vpop.f32.mrf.mxu0
    %v202 = vadd.f32 %v143, %v201
    %v203 = vpop.f32.mrf.mxu0
    %204 = vdwg.mxu0
    %v205 = vmax.f32 %v202, 0.0
    %v206 = vpack.c.bf16 %v205, %v205
    %v207 = vld [vmem:[#allocation5 + $0x88] sm:$0xf]
    %v208 = vld [vmem:[#allocation5 + $0x8c] sm:$0xf]
    %v209 = vld [vmem:[#allocation5 + $0x90] sm:$0xf]
    %v210 = vld [vmem:[#allocation5 + $0x94] sm:$0xf]
    %v211 = vld [vmem:[#allocation5 + $0x98] sm:$0xf]
    %v212 = vld [vmem:[#allocation5 + $0x9c] sm:$0xf]
    %v213 = vld [vmem:[#allocation5 + $0xa0] sm:$0xf]
    %v214 = vld [vmem:[#allocation5 + $0xa4] sm:$0xf]
    %v215 = vld [vmem:[#allocation5 + $0xa8] sm:$0xf]
    %v216 = vld [vmem:[#allocation5 + $0xac] sm:$0xf]
    %v217 = vld [vmem:[#allocation5 + $0xb0] sm:$0xf]
    %v218 = vld [vmem:[#allocation5 + $0xb4] sm:$0xf]
    %v219 = vld [vmem:[#allocation5 + $0xb8] sm:$0xf]
    %v220 = vld [vmem:[#allocation5 + $0xbc] sm:$0xf]
    %v221 = vld [vmem:[#allocation5 + $0xc0] sm:$0xf]
    %v222 = vld [vmem:[#allocation5 + $0xc4] sm:$0xf]
    %v223 = vld [vmem:[#allocation5 + $0xc8] sm:$0x1]
    %v224 = vunpack.c.l.bf16 %v223
    %v225 = vperm.slane %v224, 0
    %v242 = vunpack.c.l.b16 %v207
    %v243 = vunpack.c.l.b16 %v208
    %v244 = vunpack.c.l.b16 %v209
    %v245 = vunpack.c.l.b16 %v210
    %v246 = vunpack.c.l.b16 %v211
    %v247 = vunpack.c.l.b16 %v212
    %v248 = vunpack.c.l.b16 %v213
    %v249 = vunpack.c.l.b16 %v214
    %v250 = vunpack.c.l.b16 %v215
    %v251 = vunpack.c.l.b16 %v216
    %v252 = vunpack.c.l.b16 %v217
    %v253 = vunpack.c.l.b16 %v218
    %v254 = vunpack.c.l.b16 %v219
    %v255 = vunpack.c.l.b16 %v220
    %v256 = vunpack.c.l.b16 %v221
    %v257 = vunpack.c.l.b16 %v222
    %v258 = vpack.c.b16 %v243, %v242
    %v259 = vpack.c.b16 %v245, %v244
    %v260 = vpack.c.b16 %v247, %v246
    %v261 = vpack.c.b16 %v249, %v248
    %v262 = vpack.c.b16 %v251, %v250
    %v263 = vpack.c.b16 %v253, %v252
    %v264 = vpack.c.b16 %v255, %v254
    %v265 = vpack.c.b16 %v257, %v256
    %274 = vmatpush.bf16.msra.mxu0 %v265
    %275 = vmatpush.bf16.msra.mxu0 %v264
    %276 = vmatpush.bf16.msra.mxu0 %v263
    %277 = vmatpush.bf16.msra.mxu0 %v262
    %278 = vmatpush.bf16.msra.mxu0 %v261
    %279 = vmatpush.bf16.msra.mxu0 %v260
    %280 = vmatpush.bf16.msra.mxu0 %v259
    %281 = vmatpush.bf16.msra.mxu0 %v258
    %282 = vmatmul.bf16.gmra.mxu0 %v206
    %v283 = vpop.f32.mrf.mxu0
    %v284 = vadd.f32 %v225, %v283
    %v285 = vpop.f32.mrf.mxu0
    %286 = vdwg.mxu0
    %287 = vst [vmem:[#allocation7] sm:$0xff] %v284
    // Predicated region
    $region18: #{tpu_custom_call.1} parent=1 // pred_check
      _
    $region19: #{tpu_custom_call.1} parent=1 // pred_check_branch
      %289 = sbr.rel (0) target = $region21
    $region20: #{tpu_custom_call.1} parent=1 // pred_region
      %291 = vsyncadd [#allocation4], 0
      %s293 = sshll.u32 [#allocation7], 4
      %s294 = int_to_ptr.vmem [resolvable:$true] %s293
      %s295 = sshll.u32 %s2, 4
      %s296 = int_to_ptr.hbm [resolvable:$true] %s295
      %298 = dma.vmem_to_hbm [thread:$0]  %s294, 128, %s296, [#allocation4]
    $region21: #{tpu_custom_call.1} parent=1 // pred_fallthru
      _
    // Predicated region
    $region22: #{tpu_custom_call.1} parent=1 // pred_check
      _
    $region23: #{tpu_custom_call.1} parent=1 // pred_check_branch
      %300 = sbr.rel (0) target = $region25
    $region24: #{tpu_custom_call.1} parent=1 // pred_region
      %302 = dma.done [#allocation4], 128
    $region25: #{tpu_custom_call.1} parent=1 // pred_fallthru
      _
    %303 = vsyncpa [#allocation3], 1
    %304 = vsyncpa [#allocation6], 1
    %305 = vsyncpa [#allocation4], 1

</llo_original>
